<compile_context>
chip_gen: v7x
topology: tpu7x:2x2x1
jax: 0.10.0
libtpu: 0.0.40
codegen_flags: <defaults>
</compile_context>

<pallas_src>
import functools

import jax
import jax.numpy as jnp
from jax.experimental import pallas as pl
from jax.experimental.pallas import tpu as pltpu

LN_EPS = 1e-5        # nn.LayerNorm default eps
NEG_BIG = -9e15      # masked-attention fill value used by GraphAttentionLayer
# LML default alpha=0.0  =>  LeakyReLU(0.0) == ReLU; specialized below.


def _layernorm(v, w, b):
    mu = jnp.mean(v, axis=-1, keepdims=True)
    var = jnp.mean((v - mu) ** 2, axis=-1, keepdims=True)
    return (v - mu) * jax.lax.rsqrt(var + LN_EPS) * w + b


def _gelu_exact(v):
    # nn.GELU default is the exact (erf) formulation.
    return 0.5 * v * (1.0 + jax.lax.erf(v * (1.0 / jnp.sqrt(2.0)).astype(v.dtype)))


# --------------------------------------------------------------------------
# Stage 1: per-node projections (row-tiled; rows are independent).
# --------------------------------------------------------------------------
def gat_precompute_kernel(x_ref, ln1_w_ref, ln1_b_ref, gat_w_ref, fc_w_ref,
                          a1_ref, a2_ref,
                          whf_ref, s1_ref, s2_ref):
    h = _layernorm(x_ref[...], ln1_w_ref[...], ln1_b_ref[...])          # (T, D)
    wh = jnp.dot(h, gat_w_ref[...], preferred_element_type=jnp.float32)  # (T, O)
    # Reassociated GAT output projection: (att @ Wh) @ fc_w == att @ (Wh @ fc_w).
    whf = jnp.dot(wh, fc_w_ref[...], preferred_element_type=jnp.float32)  # (T, D)
    whf_ref[...] = whf.astype(whf_ref.dtype)
    # Attention scores via VPU multiply + lane reduce (a1/a2 stored lane-dense
    # as (1, O)) instead of degenerate output-width-1 MXU matmuls.
    s1_ref[...] = jnp.sum(wh * a1_ref[...], axis=-1, keepdims=True)      # (T, 1)
    s2_ref[...] = jnp.sum(wh * a2_ref[...], axis=-1, keepdims=True)      # (T, 1)


# --------------------------------------------------------------------------
# Stage 2: row-tiled attention + residual + MLP.
# --------------------------------------------------------------------------
def gat_mlp_kernel(x_ref, adj_ref, s1_ref, s2row_ref, whf_ref,
                   fc_b_ref, ln2_w_ref, ln2_b_ref,
                   fc1_w_ref, fc1_b_ref, fc2_w_ref, fc2_b_ref,
                   out_ref, *, mxu_dtype):
    x = x_ref[...]                                                # (T, D) f32

    # e[i, j] = LeakyReLU_0(s1[i] + s2[j]) = relu(s1[i] + s2[j])
    e = jnp.maximum(s1_ref[...] + s2row_ref[...], 0.0)           # (T, N)
    logits = jnp.where(adj_ref[...] > 0, e, NEG_BIG)
    # Softmax over dim=1 with deferred normalization (stats stay f32).
    m = jnp.max(logits, axis=-1, keepdims=True)
    p = jnp.exp(logits - m)
    l = jnp.sum(p, axis=-1, keepdims=True)
    # dropout(0.0) on the attention and DropPath(0.0) are identities (eval).

    hp = jnp.dot(p.astype(mxu_dtype), whf_ref[...],
                 preferred_element_type=jnp.float32)              # (T, D)
    hp = hp * pl.reciprocal(l, approx=True) + fc_b_ref[...]       # 1/l on EUP
    x = x + hp                                                    # residual 1

    # ---------------- MLP branch: x + Mlp(norm2(x)) ----------------
    h2 = _layernorm(x, ln2_w_ref[...], ln2_b_ref[...])
    h2 = jnp.dot(h2.astype(mxu_dtype), fc1_w_ref[...],
                 preferred_element_type=jnp.float32) + fc1_b_ref[...]
    h2 = _gelu_exact(h2)
    h2 = jnp.dot(h2.astype(mxu_dtype), fc2_w_ref[...],
                 preferred_element_type=jnp.float32) + fc2_b_ref[...]
    out_ref[...] = (x + h2).astype(out_ref.dtype)


# --------------------------------------------------------------------------
# Wrapper
# --------------------------------------------------------------------------
def _full_spec(a):
    nd = a.ndim
    return pl.BlockSpec(a.shape, lambda i, nd=nd: (0,) * nd)


def _pick_tile_n(n, vmem_budget_bytes=20 << 20):
    """Largest multiple-of-8 divisor of n such that the (tile, n) adjacency
    block (double-buffered) plus the f32 logit/exp intermediates stay well
    inside the VMEM budget (sized for v7x's 64 MiB physical VMEM)."""
    per_row = 16 * n                      # ~4 live f32 copies of an n-wide row
    cap = max(8, vmem_budget_bytes // per_row)
    t = min(n, 256, cap)
    t -= t % 8
    while t >= 8:
        if n % t == 0:
            return t
        t -= 8
    return n


def lml_forward(x, adj, params, *, tile_n=None, mxu_dtype=jnp.bfloat16,
                vmem_limit_bytes=48 * 1024 * 1024):
    """Pallas forward of LML.  `mxu_dtype=jnp.float32` gives exact f32 parity;
    bf16 (default) keeps LayerNorm / softmax stats and accumulation in f32."""
    N, D = x.shape
    assert adj.shape == (N, N)
    if tile_n is None:
        tile_n = _pick_tile_n(N)
    assert N % tile_n == 0 and (tile_n % 8 == 0 or tile_n == N)
    grid = (N // tile_n,)

    cparams = pltpu.CompilerParams(
        dimension_semantics=("parallel",),      # megacore row split on v7x
        vmem_limit_bytes=vmem_limit_bytes)

    # ---- Stage 1: whf = (LN1(x) @ W) @ fc_w, attention scores s1/s2 ----
    stage1_args = (x, params["ln1_w"], params["ln1_b"], params["gat_w"],
                   params["fc_w"], params["a1"], params["a2"])
    whf, s1, s2col = pl.pallas_call(
        gat_precompute_kernel,
        out_shape=(jax.ShapeDtypeStruct((N, D), mxu_dtype),
                   jax.ShapeDtypeStruct((N, 1), jnp.float32),
                   jax.ShapeDtypeStruct((N, 1), jnp.float32)),
        grid=grid,
        in_specs=[pl.BlockSpec((tile_n, D), lambda i: (i, 0))]
                 + [_full_spec(a) for a in stage1_args[1:]],
        out_specs=(pl.BlockSpec((tile_n, D), lambda i: (i, 0)),
                   pl.BlockSpec((tile_n, 1), lambda i: (i, 0)),
                   pl.BlockSpec((tile_n, 1), lambda i: (i, 0))),
        compiler_params=cparams,
    )(*stage1_args)

    # (N, 1) -> (1, N): contiguous reshape, pure layout plumbing in the wrapper.
    s2row = s2col.reshape(1, N)

    # MXU-path weights in the matmul dtype (accumulation stays f32 in-kernel).
    fc1_w = params["fc1_w"].astype(mxu_dtype)
    fc2_w = params["fc2_w"].astype(mxu_dtype)

    # ---- Stage 2: row-tiled attention + residual + MLP ----
    stage2_args = (x, adj, s1, s2row, whf,
                   params["fc_b"], params["ln2_w"], params["ln2_b"],
                   fc1_w, params["fc1_b"], fc2_w, params["fc2_b"])
    in_specs = [pl.BlockSpec((tile_n, D), lambda i: (i, 0)),   # x row tile
                pl.BlockSpec((tile_n, N), lambda i: (i, 0)),   # adj row tile (streamed)
                pl.BlockSpec((tile_n, 1), lambda i: (i, 0)),   # s1 row tile
                _full_spec(s2row),                             # s2 (resident)
                _full_spec(whf)]                               # whf (resident)
    in_specs += [_full_spec(a) for a in stage2_args[5:]]       # small weights

    out = pl.pallas_call(
        functools.partial(gat_mlp_kernel, mxu_dtype=mxu_dtype),
        out_shape=jax.ShapeDtypeStruct((N, D), x.dtype),
        grid=grid,
        in_specs=in_specs,
        out_specs=pl.BlockSpec((tile_n, D), lambda i: (i, 0)),
        compiler_params=cparams,
    )(*stage2_args)
    return out


def init_params(key, dim, mlp_ratio=2.0):
    out = dim // 8
    hidden = int(dim * mlp_ratio)
    ks = jax.random.split(key, 8)

    def xavier(k, shape, gain=1.414):
        fan_in, fan_out = shape[0], shape[1]
        bound = gain * (6.0 / (fan_in + fan_out)) ** 0.5
        return jax.random.uniform(k, shape, jnp.float32, -bound, bound)

    a = xavier(ks[1], (2 * out, 1))            # attention vector a: (2*O, 1)
    return dict(
        ln1_w=jnp.ones((1, dim), jnp.float32),
        ln1_b=jnp.zeros((1, dim), jnp.float32),
        gat_w=xavier(ks[0], (dim, out)),       # W: (D, O)
        a1=a[:out, :].T,                       # (1, O)  lane-dense
        a2=a[out:, :].T,                       # (1, O)  lane-dense
        fc_w=xavier(ks[2], (out, dim), gain=1.0),    # GAT output Linear (input-major)
        fc_b=0.01 * xavier(ks[5], (1, dim), gain=1.0),
        ln2_w=jnp.ones((1, dim), jnp.float32),
        ln2_b=jnp.zeros((1, dim), jnp.float32),
        fc1_w=xavier(ks[3], (dim, hidden), gain=1.0),
        fc1_b=0.01 * xavier(ks[6], (1, hidden), gain=1.0),
        fc2_w=xavier(ks[4], (hidden, dim), gain=1.0),
        fc2_b=0.01 * xavier(ks[7], (1, dim), gain=1.0),
    )


if __name__ == "__main__":
    N, DIM = 64, 128            # lane-dense feature dim; O = DIM//8 = 16, hidden = 256
    key = jax.random.PRNGKey(0)
    kx, kadj, kp = jax.random.split(key, 3)

    x = jax.random.normal(kx, (N, DIM), jnp.float32)
    # Binary adjacency with self-loops; stored in bf16 (exact for a 0/1 mask,
    # halves the dominant N^2 HBM stream — helps most on v5e).
    adj = (jax.random.uniform(kadj, (N, N)) > 0.5).astype(jnp.float32)
    adj = jnp.maximum(adj, jnp.eye(N, dtype=jnp.float32)).astype(jnp.bfloat16)

    params = init_params(kp, DIM, mlp_ratio=2.0)

    # tile_n=16 -> grid=(4,): exercises the row-tiled, double-buffered pipeline.
    out = lml_forward(x, adj, params, tile_n=16)
    jax.block_until_ready(out)
    assert out.shape == (N, DIM) and out.dtype == jnp.float32
    print("KERNEL_OK")
</pallas_src>

<mosaic_0001>
module attributes {stable_mosaic.version = 11 : i64} {
  func.func @gat_precompute_kernel(%arg0: i32, %arg1: memref<16x128xf32, #tpu.memory_space<vmem>>, %arg2: memref<1x128xf32, #tpu.memory_space<vmem>>, %arg3: memref<1x128xf32, #tpu.memory_space<vmem>>, %arg4: memref<128x16xf32, #tpu.memory_space<vmem>>, %arg5: memref<16x128xf32, #tpu.memory_space<vmem>>, %arg6: memref<1x16xf32, #tpu.memory_space<vmem>>, %arg7: memref<1x16xf32, #tpu.memory_space<vmem>>, %arg8: memref<16x128xbf16, #tpu.memory_space<vmem>>, %arg9: memref<16x1xf32, #tpu.memory_space<vmem>>, %arg10: memref<16x1xf32, #tpu.memory_space<vmem>>) attributes {dimension_semantics = [#tpu.dimension_semantics<parallel>], iteration_bounds = array<i64: 4>, scalar_prefetch = 0 : i64, scratch_operands = 0 : i64, tpu.core_type = #tpu.core_type<tc>, window_params = [{transform_indices = @transform_0, window_bounds = array<i64: 16, 128>}, {pipeline_mode = #tpu.pipeline_mode<synchronous>, transform_indices = @transform_1, window_bounds = array<i64: 1, 128>}, {pipeline_mode = #tpu.pipeline_mode<synchronous>, transform_indices = @transform_2, window_bounds = array<i64: 1, 128>}, {pipeline_mode = #tpu.pipeline_mode<synchronous>, transform_indices = @transform_3, window_bounds = array<i64: 128, 16>}, {pipeline_mode = #tpu.pipeline_mode<synchronous>, transform_indices = @transform_4, window_bounds = array<i64: 16, 128>}, {pipeline_mode = #tpu.pipeline_mode<synchronous>, transform_indices = @transform_5, window_bounds = array<i64: 1, 16>}, {pipeline_mode = #tpu.pipeline_mode<synchronous>, transform_indices = @transform_6, window_bounds = array<i64: 1, 16>}, {transform_indices = @transform_7, window_bounds = array<i64: 16, 128>}, {transform_indices = @transform_8, window_bounds = array<i64: 16, 1>}, {transform_indices = @transform_9, window_bounds = array<i64: 16, 1>}]} {
    %c0 = arith.constant 0 : index
    %c0_0 = arith.constant 0 : index
    %0 = vector.load %arg1[%c0, %c0_0] : memref<16x128xf32, #tpu.memory_space<vmem>>, vector<16x128xf32>
    %c0_1 = arith.constant 0 : index
    %c0_2 = arith.constant 0 : index
    %1 = vector.load %arg2[%c0_1, %c0_2] : memref<1x128xf32, #tpu.memory_space<vmem>>, vector<1x128xf32>
    %c0_3 = arith.constant 0 : index
    %c0_4 = arith.constant 0 : index
    %2 = vector.load %arg3[%c0_3, %c0_4] : memref<1x128xf32, #tpu.memory_space<vmem>>, vector<1x128xf32>
    %cst = arith.constant dense<0.000000e+00> : vector<16xf32>
    %3 = vector.multi_reduction <add>, %0, %cst [1] : vector<16x128xf32> to vector<16xf32>
    %4 = vector.shape_cast %3 : vector<16xf32> to vector<16x1xf32>
    %cst_5 = arith.constant 1.280000e+02 : f32
    %5 = vector.broadcast %cst_5 : f32 to vector<16x1xf32>
    %6 = arith.divf %4, %5 : vector<16x1xf32>
    %7 = vector.broadcast %6 : vector<16x1xf32> to vector<16x128xf32>
    %8 = arith.subf %0, %7 : vector<16x128xf32>
    %9 = arith.mulf %8, %8 : vector<16x128xf32>
    %cst_6 = arith.constant dense<0.000000e+00> : vector<16xf32>
    %10 = vector.multi_reduction <add>, %9, %cst_6 [1] : vector<16x128xf32> to vector<16xf32>
    %11 = vector.shape_cast %10 : vector<16xf32> to vector<16x1xf32>
    %cst_7 = arith.constant 1.280000e+02 : f32
    %12 = vector.broadcast %cst_7 : f32 to vector<16x1xf32>
    %13 = arith.divf %11, %12 : vector<16x1xf32>
    %14 = vector.broadcast %6 : vector<16x1xf32> to vector<16x128xf32>
    %15 = arith.subf %0, %14 : vector<16x128xf32>
    %cst_8 = arith.constant 9.99999974E-6 : f32
    %16 = vector.broadcast %cst_8 : f32 to vector<16x1xf32>
    %17 = arith.addf %13, %16 : vector<16x1xf32>
    %18 = math.rsqrt %17 : vector<16x1xf32>
    %19 = vector.broadcast %18 : vector<16x1xf32> to vector<16x128xf32>
    %20 = arith.mulf %15, %19 : vector<16x128xf32>
    %21 = vector.broadcast %1 : vector<1x128xf32> to vector<16x128xf32>
    %22 = arith.mulf %20, %21 : vector<16x128xf32>
    %23 = vector.broadcast %2 : vector<1x128xf32> to vector<16x128xf32>
    %24 = arith.addf %22, %23 : vector<16x128xf32>
    %c0_9 = arith.constant 0 : index
    %c0_10 = arith.constant 0 : index
    %25 = vector.load %arg4[%c0_9, %c0_10] : memref<128x16xf32, #tpu.memory_space<vmem>>, vector<128x16xf32>
    %cst_11 = arith.constant dense<0.000000e+00> : vector<16x16xf32>
    %26 = tpu.matmul %24, %25, %cst_11 {dimension_numbers = #tpu.dot_dimension_numbers<[1], [0], [0], [1], [0, 0, 1, 1], [], []>} : vector<16x128xf32>, vector<128x16xf32>, vector<16x16xf32> -> vector<16x16xf32>
    %c0_12 = arith.constant 0 : index
    %c0_13 = arith.constant 0 : index
    %27 = vector.load %arg5[%c0_12, %c0_13] : memref<16x128xf32, #tpu.memory_space<vmem>>, vector<16x128xf32>
    %cst_14 = arith.constant dense<0.000000e+00> : vector<16x128xf32>
    %28 = tpu.matmul %26, %27, %cst_14 {dimension_numbers = #tpu.dot_dimension_numbers<[1], [0], [0], [1], [0, 0, 1, 1], [], []>} : vector<16x16xf32>, vector<16x128xf32>, vector<16x128xf32> -> vector<16x128xf32>
    %29 = arith.truncf %28 : vector<16x128xf32> to vector<16x128xbf16>
    %c0_15 = arith.constant 0 : index
    %c0_16 = arith.constant 0 : index
    %30 = vector.load %arg8[%c0_15, %c0_16] : memref<16x128xbf16, #tpu.memory_space<vmem>>, vector<16x128xbf16>
    tpu.vector_store %arg8[%c0_15, %c0_16], %29 {strides = array<i32>} : memref<16x128xbf16, #tpu.memory_space<vmem>>, vector<16x128xbf16>,
    %c0_17 = arith.constant 0 : index
    %c0_18 = arith.constant 0 : index
    %31 = vector.load %arg6[%c0_17, %c0_18] : memref<1x16xf32, #tpu.memory_space<vmem>>, vector<1x16xf32>
    %32 = vector.broadcast %31 : vector<1x16xf32> to vector<16x16xf32>
    %33 = arith.mulf %26, %32 : vector<16x16xf32>
    %cst_19 = arith.constant dense<0.000000e+00> : vector<16xf32>
    %34 = vector.multi_reduction <add>, %33, %cst_19 [1] : vector<16x16xf32> to vector<16xf32>
    %35 = vector.shape_cast %34 : vector<16xf32> to vector<16x1xf32>
    %c0_20 = arith.constant 0 : index
    %c0_21 = arith.constant 0 : index
    %36 = vector.load %arg9[%c0_20, %c0_21] : memref<16x1xf32, #tpu.memory_space<vmem>>, vector<16x1xf32>
    tpu.vector_store %arg9[%c0_20, %c0_21], %35 {strides = array<i32>} : memref<16x1xf32, #tpu.memory_space<vmem>>, vector<16x1xf32>,
    %c0_22 = arith.constant 0 : index
    %c0_23 = arith.constant 0 : index
    %37 = vector.load %arg7[%c0_22, %c0_23] : memref<1x16xf32, #tpu.memory_space<vmem>>, vector<1x16xf32>
    %38 = vector.broadcast %37 : vector<1x16xf32> to vector<16x16xf32>
    %39 = arith.mulf %26, %38 : vector<16x16xf32>
    %cst_24 = arith.constant dense<0.000000e+00> : vector<16xf32>
    %40 = vector.multi_reduction <add>, %39, %cst_24 [1] : vector<16x16xf32> to vector<16xf32>
    %41 = vector.shape_cast %40 : vector<16xf32> to vector<16x1xf32>
    %c0_25 = arith.constant 0 : index
    %c0_26 = arith.constant 0 : index
    %42 = vector.load %arg10[%c0_25, %c0_26] : memref<16x1xf32, #tpu.memory_space<vmem>>, vector<16x1xf32>
    tpu.vector_store %arg10[%c0_25, %c0_26], %41 {strides = array<i32>} : memref<16x1xf32, #tpu.memory_space<vmem>>, vector<16x1xf32>,
    return
  }
  func.func @transform_0(%arg0: i32) -> (i32, i32) {
    %c0_i32 = arith.constant 0 : i32
    %c0_i32_0 = arith.constant 0 : i32
    return %arg0, %c0_i32 : i32, i32
  }
  func.func @transform_1(%arg0: i32) -> (i32, i32) {
    %c0_i32 = arith.constant 0 : i32
    %c0_i32_0 = arith.constant 0 : i32
    %c0_i32_1 = arith.constant 0 : i32
    return %c0_i32, %c0_i32_0 : i32, i32
  }
  func.func @transform_2(%arg0: i32) -> (i32, i32) {
    %c0_i32 = arith.constant 0 : i32
    %c0_i32_0 = arith.constant 0 : i32
    %c0_i32_1 = arith.constant 0 : i32
    return %c0_i32, %c0_i32_0 : i32, i32
  }
  func.func @transform_3(%arg0: i32) -> (i32, i32) {
    %c0_i32 = arith.constant 0 : i32
    %c0_i32_0 = arith.constant 0 : i32
    %c0_i32_1 = arith.constant 0 : i32
    return %c0_i32, %c0_i32_0 : i32, i32
  }
  func.func @transform_4(%arg0: i32) -> (i32, i32) {
    %c0_i32 = arith.constant 0 : i32
    %c0_i32_0 = arith.constant 0 : i32
    %c0_i32_1 = arith.constant 0 : i32
    return %c0_i32, %c0_i32_0 : i32, i32
  }
  func.func @transform_5(%arg0: i32) -> (i32, i32) {
    %c0_i32 = arith.constant 0 : i32
    %c0_i32_0 = arith.constant 0 : i32
    %c0_i32_1 = arith.constant 0 : i32
    return %c0_i32, %c0_i32_0 : i32, i32
  }
  func.func @transform_6(%arg0: i32) -> (i32, i32) {
    %c0_i32 = arith.constant 0 : i32
    %c0_i32_0 = arith.constant 0 : i32
    %c0_i32_1 = arith.constant 0 : i32
    return %c0_i32, %c0_i32_0 : i32, i32
  }
  func.func @transform_7(%arg0: i32) -> (i32, i32) {
    %c0_i32 = arith.constant 0 : i32
    %c0_i32_0 = arith.constant 0 : i32
    return %arg0, %c0_i32 : i32, i32
  }
  func.func @transform_8(%arg0: i32) -> (i32, i32) {
    %c0_i32 = arith.constant 0 : i32
    %c0_i32_0 = arith.constant 0 : i32
    return %arg0, %c0_i32 : i32, i32
  }
  func.func @transform_9(%arg0: i32) -> (i32, i32) {
    %c0_i32 = arith.constant 0 : i32
    %c0_i32_0 = arith.constant 0 : i32
    return %arg0, %c0_i32 : i32, i32
  }
}

</mosaic_0001>

<llo_original>
// kernel: tpu_custom_call.1
$region0: #{tpu_custom_call.1}
  #allocation0 [shape = 'u32[]', space=smem, size = 0x4, offset = 0x4, fixed_abs, tag = 'smem constant byte address 0x4 - core index']
  #allocation1 [shape = 'u32[144,128]{1,0:T(1,128)}', space=vmem, size = 0x12000, scoped, tag = 'internal scratch']
  %s0 = inlined_call_operand.vmem [shape: f32[64,128], index: 0, kind: input, shape index: {}]
  %s1 = inlined_call_operand.vmem [shape: f32[1,128], index: 1, kind: input, shape index: {}]
  %s2 = inlined_call_operand.vmem [shape: f32[1,128], index: 2, kind: input, shape index: {}]
  %s3 = inlined_call_operand.vmem [shape: f32[128,16], index: 3, kind: input, shape index: {}]
  %s4 = inlined_call_operand.vmem [shape: f32[16,128], index: 4, kind: input, shape index: {}]
  %s5 = inlined_call_operand.vmem [shape: f32[1,16], index: 5, kind: input, shape index: {}]
  %s6 = inlined_call_operand.vmem [shape: f32[1,16], index: 6, kind: input, shape index: {}]
  %s7 = inlined_call_operand.hbm [shape: bf16[64,128], index: 7, kind: output, shape index: {0}]
  %s8 = inlined_call_operand.vmem [shape: f32[64,1], index: 8, kind: output, shape index: {1}]
  %s9 = inlined_call_operand.vmem [shape: f32[64,1], index: 9, kind: output, shape index: {2}]
  %10 = xla_tuple %s7, %s8, %s9
  %s11 = sld [smem:[#allocation0]]
  $region77: #{tpu_custom_call.1} parent=0
    _
  %s13 = ssub.s32 1, %s11
  %s14 = scalar_select 0, %s13, %s11
  $region1: #{tpu_custom_call.1} parent=0
    #allocation2 [shape = 'u8[8192]{0}', space=vmem, size = 0x2000, scoped, tag = 'output window, operand 0']
    #allocation3 [shape = 's32[2]{0}', space=sflag, size = 0x8, scoped, tag = 'scoped memory for tpu_custom_call.1']
    %15 = vsyncpa [#allocation3], 0
    %s16 = scalar_lea.sflag [#allocation3], 1
    %17 = vsyncpa %s16, 0
    loop: start=0, step=1, limit=6
    $region2: #{tpu_custom_call.1} parent=1 // loop_pre_header
      _
    $region3: #{tpu_custom_call.1} parent=1 // loop_header
      %s19 = sphi 0, %s23
      %p20 = scmp.ge.s32.totalorder %s19, 6
      %s29 = sphi 0, %s31
      %s32 = sphi 0, %s29
      %s33 = sphi 0, %s32
      %s49 = sphi 0, %s33
      %s53 = sphi 0, %s53
      %s55 = sphi 0, %s53
      %s56 = sphi 0, %s55
      %s70 = sphi 0, %s56
      %s74 = sphi 0, %s74
      %s76 = sphi 0, %s74
      %s77 = sphi 0, %s76
      %s91 = sphi 0, %s77
      %s95 = sphi 0, %s95
      %s97 = sphi 0, %s95
      %s98 = sphi 0, %s97
      %s112 = sphi 0, %s98
      %s116 = sphi 0, %s116
      %s118 = sphi 0, %s116
      %s119 = sphi 0, %s118
      %s133 = sphi 0, %s119
      %s137 = sphi 0, %s137
      %s139 = sphi 0, %s137
      %s140 = sphi 0, %s139
      %s154 = sphi 0, %s140
      %s158 = sphi 0, %s158
      %s160 = sphi 0, %s158
      %s161 = sphi 0, %s160
      %s175 = sphi 0, %s161
      %s181 = sphi 0, %s183
      %s184 = sphi 0, %s181
      %s185 = sphi 0, %s184
      %s201 = sphi 0, %s185
      %s207 = sphi 0, %s209
      %s210 = sphi 0, %s207
      %s211 = sphi 0, %s210
      %s227 = sphi 0, %s211
      %s233 = sphi 0, %s235
      %s236 = sphi 0, %s233
      %s237 = sphi 0, %s236
      %s253 = sphi 0, %s237
    $region4: #{tpu_custom_call.1} parent=1 // loop_header_branch
      %22 = sbr.rel (%p20) target = $region8
    $region5: #{tpu_custom_call.1} parent=1 // loop_body
      %s24 = ssub.s32 %s19, 1
      %s25 = ssub.s32 %s19, 2
      %s26 = sadd.s32 %s19, 1
      %s27 = ssub.s32 %s19, %s26
      %p28 = scmp.eq.s32.totalorder %s27, 0
      %s30 = sadd.s32 %s29, 1
      %s31 = scalar_select %p28, %s29, %s30
      %p34 = pneg %p28
      %p35 = scmp.eq.s32.totalorder %s19, 3
      %p36 = por %p34, %p35
      %p37 = scmp.ne.s32.totalorder %s29, %s32
      %p38 = scmp.eq.s32.totalorder %s19, 0
      %p39 = por %p37, %p38
      %p40 = scmp.ne.s32.totalorder %s29, %s32
      %p41 = scmp.eq.s32.totalorder %s24, 3
      %p42 = por %p40, %p41
      %p43 = scmp.ne.s32.totalorder %s32, %s33
      %p44 = scmp.eq.s32.totalorder %s24, 0
      %p45 = por %p43, %p44
      %p46 = scmp.ne.s32.totalorder %s32, %s33
      %p47 = scmp.eq.s32.totalorder %s25, 3
      %p48 = por %p46, %p47
      %p50 = scmp.ne.s32.totalorder %s33, %s49
      %p51 = scmp.eq.s32.totalorder %s25, 0
      %p52 = por %p50, %p51
      %s54 = sadd.s32 %s53, 1
      %p57 = scmp.eq.s32.totalorder %s19, 3
      %p58 = scmp.ne.s32.totalorder %s53, %s55
      %p59 = scmp.eq.s32.totalorder %s19, 0
      %p60 = por %p58, %p59
      %p61 = scmp.ne.s32.totalorder %s53, %s55
      %p62 = scmp.eq.s32.totalorder %s24, 3
      %p63 = por %p61, %p62
      %p64 = scmp.ne.s32.totalorder %s55, %s56
      %p65 = scmp.eq.s32.totalorder %s24, 0
      %p66 = por %p64, %p65
      %p67 = scmp.ne.s32.totalorder %s55, %s56
      %p68 = scmp.eq.s32.totalorder %s25, 3
      %p69 = por %p67, %p68
      %p71 = scmp.ne.s32.totalorder %s56, %s70
      %p72 = scmp.eq.s32.totalorder %s25, 0
      %p73 = por %p71, %p72
      %s75 = sadd.s32 %s74, 1
      %p78 = scmp.eq.s32.totalorder %s19, 3
      %p79 = scmp.ne.s32.totalorder %s74, %s76
      %p80 = scmp.eq.s32.totalorder %s19, 0
      %p81 = por %p79, %p80
      %p82 = scmp.ne.s32.totalorder %s74, %s76
      %p83 = scmp.eq.s32.totalorder %s24, 3
      %p84 = por %p82, %p83
      %p85 = scmp.ne.s32.totalorder %s76, %s77
      %p86 = scmp.eq.s32.totalorder %s24, 0
      %p87 = por %p85, %p86
      %p88 = scmp.ne.s32.totalorder %s76, %s77
      %p89 = scmp.eq.s32.totalorder %s25, 3
      %p90 = por %p88, %p89
      %p92 = scmp.ne.s32.totalorder %s77, %s91
      %p93 = scmp.eq.s32.totalorder %s25, 0
      %p94 = por %p92, %p93
      %s96 = sadd.s32 %s95, 1
      %p99 = scmp.eq.s32.totalorder %s19, 3
      %p100 = scmp.ne.s32.totalorder %s95, %s97
      %p101 = scmp.eq.s32.totalorder %s19, 0
      %p102 = por %p100, %p101
      %p103 = scmp.ne.s32.totalorder %s95, %s97
      %p104 = scmp.eq.s32.totalorder %s24, 3
      %p105 = por %p103, %p104
      %p106 = scmp.ne.s32.totalorder %s97, %s98
      %p107 = scmp.eq.s32.totalorder %s24, 0
      %p108 = por %p106, %p107
      %p109 = scmp.ne.s32.totalorder %s97, %s98
      %p110 = scmp.eq.s32.totalorder %s25, 3
      %p111 = por %p109, %p110
      %p113 = scmp.ne.s32.totalorder %s98, %s112
      %p114 = scmp.eq.s32.totalorder %s25, 0
      %p115 = por %p113, %p114
      %s117 = sadd.s32 %s116, 1
      %p120 = scmp.eq.s32.totalorder %s19, 3
      %p121 = scmp.ne.s32.totalorder %s116, %s118
      %p122 = scmp.eq.s32.totalorder %s19, 0
      %p123 = por %p121, %p122
      %p124 = scmp.ne.s32.totalorder %s116, %s118
      %p125 = scmp.eq.s32.totalorder %s24, 3
      %p126 = por %p124, %p125
      %p127 = scmp.ne.s32.totalorder %s118, %s119
      %p128 = scmp.eq.s32.totalorder %s24, 0
      %p129 = por %p127, %p128
      %p130 = scmp.ne.s32.totalorder %s118, %s119
      %p131 = scmp.eq.s32.totalorder %s25, 3
      %p132 = por %p130, %p131
      %p134 = scmp.ne.s32.totalorder %s119, %s133
      %p135 = scmp.eq.s32.totalorder %s25, 0
      %p136 = por %p134, %p135
      %s138 = sadd.s32 %s137, 1
      %p141 = scmp.eq.s32.totalorder %s19, 3
      %p142 = scmp.ne.s32.totalorder %s137, %s139
      %p143 = scmp.eq.s32.totalorder %s19, 0
      %p144 = por %p142, %p143
      %p145 = scmp.ne.s32.totalorder %s137, %s139
      %p146 = scmp.eq.s32.totalorder %s24, 3
      %p147 = por %p145, %p146
      %p148 = scmp.ne.s32.totalorder %s139, %s140
      %p149 = scmp.eq.s32.totalorder %s24, 0
      %p150 = por %p148, %p149
      %p151 = scmp.ne.s32.totalorder %s139, %s140
      %p152 = scmp.eq.s32.totalorder %s25, 3
      %p153 = por %p151, %p152
      %p155 = scmp.ne.s32.totalorder %s140, %s154
      %p156 = scmp.eq.s32.totalorder %s25, 0
      %p157 = por %p155, %p156
      %s159 = sadd.s32 %s158, 1
      %p162 = scmp.eq.s32.totalorder %s19, 3
      %p163 = scmp.ne.s32.totalorder %s158, %s160
      %p164 = scmp.eq.s32.totalorder %s19, 0
      %p165 = por %p163, %p164
      %p166 = scmp.ne.s32.totalorder %s158, %s160
      %p167 = scmp.eq.s32.totalorder %s24, 3
      %p168 = por %p166, %p167
      %p169 = scmp.ne.s32.totalorder %s160, %s161
      %p170 = scmp.eq.s32.totalorder %s24, 0
      %p171 = por %p169, %p170
      %p172 = scmp.ne.s32.totalorder %s160, %s161
      %p173 = scmp.eq.s32.totalorder %s25, 3
      %p174 = por %p172, %p173
      %p176 = scmp.ne.s32.totalorder %s161, %s175
      %p177 = scmp.eq.s32.totalorder %s25, 0
      %p178 = por %p176, %p177
      %s179 = ssub.s32 %s19, %s26
      %p180 = scmp.eq.s32.totalorder %s179, 0
      %s182 = sadd.s32 %s181, 1
      %s183 = scalar_select %p180, %s181, %s182
      %p186 = pneg %p180
      %p187 = scmp.eq.s32.totalorder %s19, 3
      %p188 = por %p186, %p187
      %p189 = scmp.ne.s32.totalorder %s181, %s184
      %p190 = scmp.eq.s32.totalorder %s19, 0
      %p191 = por %p189, %p190
      %p192 = scmp.ne.s32.totalorder %s181, %s184
      %p193 = scmp.eq.s32.totalorder %s24, 3
      %p194 = por %p192, %p193
      %p195 = scmp.ne.s32.totalorder %s184, %s185
      %p196 = scmp.eq.s32.totalorder %s24, 0
      %p197 = por %p195, %p196
      %p198 = scmp.ne.s32.totalorder %s184, %s185
      %p199 = scmp.eq.s32.totalorder %s25, 3
      %p200 = por %p198, %p199
      %p202 = scmp.ne.s32.totalorder %s185, %s201
      %p203 = scmp.eq.s32.totalorder %s25, 0
      %p204 = por %p202, %p203
      %s205 = ssub.s32 %s19, %s26
      %p206 = scmp.eq.s32.totalorder %s205, 0
      %s208 = sadd.s32 %s207, 1
      %s209 = scalar_select %p206, %s207, %s208
      %p212 = pneg %p206
      %p213 = scmp.eq.s32.totalorder %s19, 3
      %p214 = por %p212, %p213
      %p215 = scmp.ne.s32.totalorder %s207, %s210
      %p216 = scmp.eq.s32.totalorder %s19, 0
      %p217 = por %p215, %p216
      %p218 = scmp.ne.s32.totalorder %s207, %s210
      %p219 = scmp.eq.s32.totalorder %s24, 3
      %p220 = por %p218, %p219
      %p221 = scmp.ne.s32.totalorder %s210, %s211
      %p222 = scmp.eq.s32.totalorder %s24, 0
      %p223 = por %p221, %p222
      %p224 = scmp.ne.s32.totalorder %s210, %s211
      %p225 = scmp.eq.s32.totalorder %s25, 3
      %p226 = por %p224, %p225
      %p228 = scmp.ne.s32.totalorder %s211, %s227
      %p229 = scmp.eq.s32.totalorder %s25, 0
      %p230 = por %p228, %p229
      %s231 = ssub.s32 %s19, %s26
      %p232 = scmp.eq.s32.totalorder %s231, 0
      %s234 = sadd.s32 %s233, 1
      %s235 = scalar_select %p232, %s233, %s234
      %p238 = pneg %p232
      %p239 = scmp.eq.s32.totalorder %s19, 3
      %p240 = por %p238, %p239
      %p241 = scmp.ne.s32.totalorder %s233, %s236
      %p242 = scmp.eq.s32.totalorder %s19, 0
      %p243 = por %p241, %p242
      %p244 = scmp.ne.s32.totalorder %s233, %s236
      %p245 = scmp.eq.s32.totalorder %s24, 3
      %p246 = por %p244, %p245
      %p247 = scmp.ne.s32.totalorder %s236, %s237
      %p248 = scmp.eq.s32.totalorder %s24, 0
      %p249 = por %p247, %p248
      %p250 = scmp.ne.s32.totalorder %s236, %s237
      %p251 = scmp.eq.s32.totalorder %s25, 3
      %p252 = por %p250, %p251
      %p254 = scmp.ne.s32.totalorder %s237, %s253
      %p255 = scmp.eq.s32.totalorder %s25, 0
      %p256 = por %p254, %p255
      %p257 = scmp.le.s32.totalorder 1, %s19
      %p258 = scmp.lt.s32.totalorder %s19, 5
      %p259 = pnand %p257, %p258
      %p260 = pneg %p259
      // Predicated region
      $region9: #{tpu_custom_call.1} parent=5 // pred_check
        _
      $region10: #{tpu_custom_call.1} parent=5 // pred_check_branch
        %262 = sbr.rel (%p259) target = $region12
      $region11: #{tpu_custom_call.1} parent=5 // pred_region
        %s263 = ssub.s32 %s19, 1
        // Predicated region
        $region13: #{tpu_custom_call.1} parent=11 // pred_check
          %p264 = pneg %p66
        $region14: #{tpu_custom_call.1} parent=11 // pred_check_branch
          %266 = sbr.rel (%p264) target = $region16
        $region15: #{tpu_custom_call.1} parent=11 // pred_region
          _
        $region16: #{tpu_custom_call.1} parent=11 // pred_fallthru
          _
        // Predicated region
        $region17: #{tpu_custom_call.1} parent=11 // pred_check
          %p267 = pneg %p87
        $region18: #{tpu_custom_call.1} parent=11 // pred_check_branch
          %269 = sbr.rel (%p267) target = $region20
        $region19: #{tpu_custom_call.1} parent=11 // pred_region
          _
        $region20: #{tpu_custom_call.1} parent=11 // pred_fallthru
          _
        // Predicated region
        $region21: #{tpu_custom_call.1} parent=11 // pred_check
          %p270 = pneg %p108
        $region22: #{tpu_custom_call.1} parent=11 // pred_check_branch
          %272 = sbr.rel (%p270) target = $region24
        $region23: #{tpu_custom_call.1} parent=11 // pred_region
          _
        $region24: #{tpu_custom_call.1} parent=11 // pred_fallthru
          _
        // Predicated region
        $region25: #{tpu_custom_call.1} parent=11 // pred_check
          %p273 = pneg %p129
        $region26: #{tpu_custom_call.1} parent=11 // pred_check_branch
          %275 = sbr.rel (%p273) target = $region28
        $region27: #{tpu_custom_call.1} parent=11 // pred_region
          _
        $region28: #{tpu_custom_call.1} parent=11 // pred_fallthru
          _
        // Predicated region
        $region29: #{tpu_custom_call.1} parent=11 // pred_check
          %p276 = pneg %p150
        $region30: #{tpu_custom_call.1} parent=11 // pred_check_branch
          %278 = sbr.rel (%p276) target = $region32
        $region31: #{tpu_custom_call.1} parent=11 // pred_region
          _
        $region32: #{tpu_custom_call.1} parent=11 // pred_fallthru
          _
        // Predicated region
        $region33: #{tpu_custom_call.1} parent=11 // pred_check
          %p279 = pneg %p171
        $region34: #{tpu_custom_call.1} parent=11 // pred_check_branch
          %281 = sbr.rel (%p279) target = $region36
        $region35: #{tpu_custom_call.1} parent=11 // pred_region
          _
        $region36: #{tpu_custom_call.1} parent=11 // pred_fallthru
          _
      $region12: #{tpu_custom_call.1} parent=5 // pred_fallthru
        _
      %p282 = scmp.lt.s32.totalorder %s19, 4
      // Predicated region
      $region37: #{tpu_custom_call.1} parent=5 // pred_check
        %p283 = pneg %p282
      $region38: #{tpu_custom_call.1} parent=5 // pred_check_branch
        %285 = sbr.rel (%p283) target = $region40
      $region39: #{tpu_custom_call.1} parent=5 // pred_region
        // Predicated region
        $region41: #{tpu_custom_call.1} parent=39 // pred_check
          %p286 = pneg %p39
        $region42: #{tpu_custom_call.1} parent=39 // pred_check_branch
          %288 = sbr.rel (%p286) target = $region44
        $region43: #{tpu_custom_call.1} parent=39 // pred_region
          %s289 = smul.u32 2, %s19
          %p290 = scmp.lt.s32.totalorder %s289, 7
          %s291 = scalar_select %p290, %s289, 7
          %s292 = smul.addr %s291, 8
          %s293 = scalar_lea.vmem %s0, %s292
          %s294 = smul.u32 2, %s19
        $region44: #{tpu_custom_call.1} parent=39 // pred_fallthru
          _
      $region40: #{tpu_custom_call.1} parent=5 // pred_fallthru
        _
      %p295 = scmp.le.s32.totalorder 1, %s19
      %p296 = scmp.lt.s32.totalorder %s19, 5
      %p297 = pnand %p295, %p296
      %p298 = pneg %p297
      // Predicated region
      $region45: #{tpu_custom_call.1} parent=5 // pred_check
        _
      $region46: #{tpu_custom_call.1} parent=5 // pred_check_branch
        %300 = sbr.rel (%p297) target = $region48
      $region47: #{tpu_custom_call.1} parent=5 // pred_region
        %s301 = ssub.s32 %s19, 1
        %s302 = smul.u32 2, %s24
        %p303 = scmp.lt.s32.totalorder %s302, 7
        %s304 = scalar_select %p303, %s302, 7
        %s305 = smul.addr %s304, 8
        %s306 = scalar_lea.vmem %s0, %s305
        %p307 = pneg %p45
        %p308 = pneg %p42
        %p309 = pneg %p66
        %p310 = pneg %p63
        %p311 = pneg %p87
        %p312 = pneg %p84
        %p313 = pneg %p108
        %p314 = pneg %p105
        %p315 = pneg %p129
        %p316 = pneg %p126
        %p317 = pneg %p150
        %p318 = pneg %p147
        %p319 = pneg %p171
        %p320 = pneg %p168
        %p321 = pneg %p197
        %p322 = pneg %p194
        %s323 = sand.u32 %s184, 1
        %s324 = scalar_lea.sflag [#allocation3], %s323
        %s325 = sand.u32 %s184, 1
        %s326 = smul.addr %s325, 8
        %s327 = scalar_lea.vmem [#allocation2], %s326
        %p328 = pneg %p223
        %p329 = pneg %p220
        %s330 = smul.u32 2, %s24
        %p331 = scmp.lt.s32.totalorder %s330, 7
        %s332 = scalar_select %p331, %s330, 7
        %s333 = smul.addr %s332, 8
        %s334 = scalar_lea.vmem %s8, %s333
        %p335 = pneg %p249
        %p336 = pneg %p246
        %s337 = smul.u32 2, %s24
        %p338 = scmp.lt.s32.totalorder %s337, 7
        %s339 = scalar_select %p338, %s337, 7
        %s340 = smul.addr %s339, 8
        %s341 = scalar_lea.vmem %s9, %s340
        %s342 = smul.u32 2, %s24
        %p343 = scmp.lt.s32.totalorder %s342, 7
        %s344 = scalar_select %p343, %s342, 7
        %s345 = smul.addr %s344, 8
        %s346 = scalar_lea.vmem %s0, %s345
        %s347 = smul.u32 2, %s24
        %s348 = smul.u32 2, %s24
        %s349 = smul.u32 2, %s24
        %p350 = scmp.lt.s32.totalorder %s349, 7
        %s351 = scalar_select %p350, %s349, 7
        %s352 = smul.addr %s351, 8
        %s353 = scalar_lea.vmem %s8, %s352
        %s354 = smul.u32 2, %s24
        %s355 = smul.u32 2, %s24
        %p356 = scmp.lt.s32.totalorder %s355, 7
        %s357 = scalar_select %p356, %s355, 7
        %s358 = smul.addr %s357, 8
        %s359 = scalar_lea.vmem %s9, %s358
        %s360 = smul.u32 2, %s24
        %v361 = vld [vmem:[%s346] sm:$0xff]
        %v362 = vld [vmem:[%s346 + $0x8] sm:$0xff]
        %v363 = vld [vmem:[%s1] sm:$0x1]
        %v364 = vld [vmem:[%s2] sm:$0x1]
        %365 = vadd.xlane.f32.xlu0 %v361
        %v366 = vpop.xlane.xlu0 %365
        %367 = vadd.xlane.f32.xlu0 %v362
        %v368 = vpop.xlane.xlu0 %367
        %v369 = vrcp.pop 128.0
        %v370 = vmul.f32 %v366, %v369
        %v371 = vmul.f32 %v368, %v369
        %v372 = vsub.f32 %v361, %v370
        %v373 = vsub.f32 %v362, %v371
        %v374 = vmul.f32 %v372, %v372
        %v375 = vmul.f32 %v373, %v373
        %376 = vadd.xlane.f32.xlu0 %v374
        %v377 = vpop.xlane.xlu0 %376
        %378 = vadd.xlane.f32.xlu0 %v375
        %v379 = vpop.xlane.xlu0 %378
        %v380 = vmul.f32 %v377, %v369
        %v381 = vmul.f32 %v379, %v369
        %v382 = vadd.f32 %v380, 1e-05
        %v383 = vadd.f32 %v381, 1e-05
        %v384 = vrsqrt.pop %v382
        %v385 = vrsqrt.pop %v383
        %v386 = vmul.f32 %v372, %v384
        %v387 = vmul.f32 %v373, %v385
        %v389 = vlaneseq
        %v390 = vshrl.u32 %v389, 7
        %v391 = vsub.s32 0, %v390
        %v392 = vrot.slane %v363, %v391
        %v394 = vmul.f32 %v386, %v392
        %v395 = vmul.f32 %v387, %v392
        %v397 = vlaneseq
        %v398 = vshrl.u32 %v397, 7
        %v399 = vsub.s32 0, %v398
        %v400 = vrot.slane %v364, %v399
        %v402 = vadd.f32 %v394, %v400
        %v403 = vadd.f32 %v395, %v400
        %v404 = vld [vmem:[%s3] sm:$0xff]
        %v405 = vld [vmem:[%s3 + $0x8] sm:$0xff]
        %v406 = vld [vmem:[%s3 + $0x10] sm:$0xff]
        %v407 = vld [vmem:[%s3 + $0x18] sm:$0xff]
        %v408 = vld [vmem:[%s3 + $0x20] sm:$0xff]
        %v409 = vld [vmem:[%s3 + $0x28] sm:$0xff]
        %v410 = vld [vmem:[%s3 + $0x30] sm:$0xff]
        %v411 = vld [vmem:[%s3 + $0x38] sm:$0xff]
        %v412 = vld [vmem:[%s3 + $0x40] sm:$0xff]
        %v413 = vld [vmem:[%s3 + $0x48] sm:$0xff]
        %v414 = vld [vmem:[%s3 + $0x50] sm:$0xff]
        %v415 = vld [vmem:[%s3 + $0x58] sm:$0xff]
        %v416 = vld [vmem:[%s3 + $0x60] sm:$0xff]
        %v417 = vld [vmem:[%s3 + $0x68] sm:$0xff]
        %v418 = vld [vmem:[%s3 + $0x70] sm:$0xff]
        %v419 = vld [vmem:[%s3 + $0x78] sm:$0xff]
        %420 = vmatprep.subr.mxu0 0.0
        %421 = vmatpush1.msra.mxu0 %v404
        %422 = vmatprep.subr.mxu0 0.0
        %423 = vmatpush1.msra.mxu0 %v405
        %424 = vmatprep.subr.mxu0 0.0
        %425 = vmatpush1.msra.mxu0 %v406
        %426 = vmatprep.subr.mxu0 0.0
        %427 = vmatpush1.msra.mxu0 %v407
        %428 = vmatprep.subr.mxu0 0.0
        %429 = vmatpush1.msra.mxu0 %v408
        %430 = vmatprep.subr.mxu0 0.0
        %431 = vmatpush1.msra.mxu0 %v409
        %432 = vmatprep.subr.mxu0 0.0
        %433 = vmatpush1.msra.mxu0 %v410
        %434 = vmatprep.subr.mxu0 0.0
        %435 = vmatpush1.msra.mxu0 %v411
        %436 = vmatprep.subr.mxu0 0.0
        %437 = vmatpush1.msra.mxu0 %v412
        %438 = vmatprep.subr.mxu0 0.0
        %439 = vmatpush1.msra.mxu0 %v413
        %440 = vmatprep.subr.mxu0 0.0
        %441 = vmatpush1.msra.mxu0 %v414
        %442 = vmatprep.subr.mxu0 0.0
        %443 = vmatpush1.msra.mxu0 %v415
        %444 = vmatprep.subr.mxu0 0.0
        %445 = vmatpush1.msra.mxu0 %v416
        %446 = vmatprep.subr.mxu0 0.0
        %447 = vmatpush1.msra.mxu0 %v417
        %448 = vmatprep.subr.mxu0 0.0
        %449 = vmatpush1.msra.mxu0 %v418
        %450 = vmatprep.subr.mxu0 0.0
        %451 = vmatpush1.msra.mxu0 %v419
        %452 = vmatprep.subr.mxu0 0.0
        %453 = vmatpush1.msra.mxu0 0.0
        %454 = vmatprep.subr.mxu0 0.0
        %455 = vmatpush1.msra.mxu0 0.0
        %456 = vmatprep.subr.mxu0 0.0
        %457 = vmatpush1.msra.mxu0 0.0
        %458 = vmatprep.subr.mxu0 0.0
        %459 = vmatpush1.msra.mxu0 0.0
        %460 = vmatprep.subr.mxu0 0.0
        %461 = vmatpush1.msra.mxu0 0.0
        %462 = vmatprep.subr.mxu0 0.0
        %463 = vmatpush1.msra.mxu0 0.0
        %464 = vmatprep.subr.mxu0 0.0
        %465 = vmatpush1.msra.mxu0 0.0
        %466 = vmatprep.subr.mxu0 0.0
        %467 = vmatpush1.msra.mxu0 0.0
        %468 = vmatprep.subr.mxu0 0.0
        %469 = vmatpush1.msra.mxu0 0.0
        %470 = vmatprep.subr.mxu0 0.0
        %471 = vmatpush1.msra.mxu0 0.0
        %472 = vmatprep.subr.mxu0 0.0
        %473 = vmatpush1.msra.mxu0 0.0
        %474 = vmatprep.subr.mxu0 0.0
        %475 = vmatpush1.msra.mxu0 0.0
        %476 = vmatprep.subr.mxu0 0.0
        %477 = vmatpush1.msra.mxu0 0.0
        %478 = vmatprep.subr.mxu0 0.0
        %479 = vmatpush1.msra.mxu0 0.0
        %480 = vmatprep.subr.mxu0 0.0
        %481 = vmatpush1.msra.mxu0 0.0
        %482 = vmatprep.subr.mxu0 0.0
        %483 = vmatpush1.msra.mxu0 0.0
        %484 = vmatprep.mubr.f32.mxu0 0.0
        %485 = vmatmul.mubr.f32.gmra.mrb[0].mxu0 %v402
        %v486 = vpop.f32.mrb[0].mxu0
        %v487 = vadd.f32 0.0, %v486
        %v488 = vpop.f32.mrb[0].mxu0
        %489 = vmatprep.mubr.f32.mxu0 0.0
        %490 = vmatmul.mubr.f32.gmra.mrb[0].mxu0 %v403
        %v491 = vpop.f32.mrb[0].mxu0
        %v492 = vadd.f32 0.0, %v491
        %v493 = vpop.f32.mrb[0].mxu0
        %494 = vdwg.mxu0
        %v495 = vld [vmem:[%s4] sm:$0xff]
        %v496 = vld [vmem:[%s4 + $0x8] sm:$0xff]
        %vm497 = vcmask 130048
        %v499 = vsel %vm497, %v487, 0
        %v502 = vsel %vm497, %v492, 0
        %504 = vmatprep.subr.mxu0 0.0
        %505 = vmatpush1.msra.mxu0 %v495
        %506 = vmatprep.subr.mxu0 0.0
        %507 = vmatpush1.msra.mxu0 %v496
        %508 = vmatprep.subr.mxu0 0.0
        %509 = vmatpush1.msra.mxu0 0.0
        %510 = vmatprep.subr.mxu0 0.0
        %511 = vmatpush1.msra.mxu0 0.0
        %512 = vmatprep.subr.mxu0 0.0
        %513 = vmatpush1.msra.mxu0 0.0
        %514 = vmatprep.subr.mxu0 0.0
        %515 = vmatpush1.msra.mxu0 0.0
        %516 = vmatprep.subr.mxu0 0.0
        %517 = vmatpush1.msra.mxu0 0.0
        %518 = vmatprep.subr.mxu0 0.0
        %519 = vmatpush1.msra.mxu0 0.0
        %520 = vmatprep.subr.mxu0 0.0
        %521 = vmatpush1.msra.mxu0 0.0
        %522 = vmatprep.subr.mxu0 0.0
        %523 = vmatpush1.msra.mxu0 0.0
        %524 = vmatprep.subr.mxu0 0.0
        %525 = vmatpush1.msra.mxu0 0.0
        %526 = vmatprep.subr.mxu0 0.0
        %527 = vmatpush1.msra.mxu0 0.0
        %528 = vmatprep.subr.mxu0 0.0
        %529 = vmatpush1.msra.mxu0 0.0
        %530 = vmatprep.subr.mxu0 0.0
        %531 = vmatpush1.msra.mxu0 0.0
        %532 = vmatprep.subr.mxu0 0.0
        %533 = vmatpush1.msra.mxu0 0.0
        %534 = vmatprep.subr.mxu0 0.0
        %535 = vmatpush1.msra.mxu0 0.0
        %536 = vmatprep.subr.mxu0 0.0
        %537 = vmatpush1.msra.mxu0 0.0
        %538 = vmatprep.subr.mxu0 0.0
        %539 = vmatpush1.msra.mxu0 0.0
        %540 = vmatprep.subr.mxu0 0.0
        %541 = vmatpush1.msra.mxu0 0.0
        %542 = vmatprep.subr.mxu0 0.0
        %543 = vmatpush1.msra.mxu0 0.0
        %544 = vmatprep.subr.mxu0 0.0
        %545 = vmatpush1.msra.mxu0 0.0
        %546 = vmatprep.subr.mxu0 0.0
        %547 = vmatpush1.msra.mxu0 0.0
        %548 = vmatprep.subr.mxu0 0.0
        %549 = vmatpush1.msra.mxu0 0.0
        %550 = vmatprep.subr.mxu0 0.0
        %551 = vmatpush1.msra.mxu0 0.0
        %552 = vmatprep.subr.mxu0 0.0
        %553 = vmatpush1.msra.mxu0 0.0
        %554 = vmatprep.subr.mxu0 0.0
        %555 = vmatpush1.msra.mxu0 0.0
        %556 = vmatprep.subr.mxu0 0.0
        %557 = vmatpush1.msra.mxu0 0.0
        %558 = vmatprep.subr.mxu0 0.0
        %559 = vmatpush1.msra.mxu0 0.0
        %560 = vmatprep.subr.mxu0 0.0
        %561 = vmatpush1.msra.mxu0 0.0
        %562 = vmatprep.subr.mxu0 0.0
        %563 = vmatpush1.msra.mxu0 0.0
        %564 = vmatprep.subr.mxu0 0.0
        %565 = vmatpush1.msra.mxu0 0.0
        %566 = vmatprep.subr.mxu0 0.0
        %567 = vmatpush1.msra.mxu0 0.0
        %568 = vmatprep.mubr.f32.mxu0 0.0
        %569 = vmatmul.mubr.f32.gmra.mrb[0].mxu0 %v499
        %v570 = vpop.f32.mrb[0].mxu0
        %v571 = vadd.f32 0.0, %v570
        %v572 = vpop.f32.mrb[0].mxu0
        %573 = vmatprep.mubr.f32.mxu0 0.0
        %574 = vmatmul.mubr.f32.gmra.mrb[0].mxu0 %v502
        %v575 = vpop.f32.mrb[0].mxu0
        %v576 = vadd.f32 0.0, %v575
        %v577 = vpop.f32.mrb[0].mxu0
        %578 = vdwg.mxu0
        %v579 = vpack.c.bf16 %v576, %v571
        %v581 = vunpack.c.l.b16 %v579
        %v582 = vunpack.c.h.b16 %v579
        %v583 = vpack.c.b16 %v581, %v581
        %v584 = vpack.c.b16 %v582, %v582
        %587 = vst [vmem:[%s327] sm:$0xf] %v583
        %588 = vst [vmem:[%s327 + $0x4] sm:$0xf] %v584
        %v589 = vld [vmem:[%s5] sm:$0x1]
        %v591 = vlaneseq
        %v592 = vshrl.u32 %v591, 7
        %v593 = vsub.s32 0, %v592
        %v594 = vrot.slane %v589, %v593
        %v596 = vmul.f32 %v487, %v594
        %v597 = vmul.f32 %v492, %v594
        %v598 = vsel %vm497, %v596, 0.0
        %599 = vadd.xlane.f32.xlu0 %v598
        %v600 = vpop.xlane.xlu0 %599
        %v601 = vsel %vm497, %v597, 0.0
        %602 = vadd.xlane.f32.xlu0 %v601
        %v603 = vpop.xlane.xlu0 %602
        %vm604 = vcmask 7168
        %605 = vst.msk [vmem:[%s353] sm:$0xff] %vm604, %v600
        %606 = vst.msk [vmem:[%s353 + $0x8] sm:$0xff] %vm604, %v603
        %v607 = vld [vmem:[%s6] sm:$0x1]
        %v609 = vlaneseq
        %v610 = vshrl.u32 %v609, 7
        %v611 = vsub.s32 0, %v610
        %v612 = vrot.slane %v607, %v611
        %v614 = vmul.f32 %v487, %v612
        %v615 = vmul.f32 %v492, %v612
        %v616 = vsel %vm497, %v614, 0.0
        %617 = vadd.xlane.f32.xlu0 %v616
        %v618 = vpop.xlane.xlu0 %617
        %v619 = vsel %vm497, %v615, 0.0
        %620 = vadd.xlane.f32.xlu0 %v619
        %v621 = vpop.xlane.xlu0 %620
        %622 = vst.msk [vmem:[%s359] sm:$0xff] %vm604, %v618
        %623 = vst.msk [vmem:[%s359 + $0x8] sm:$0xff] %vm604, %v621
        %s624 = sand.u32 %s184, 1
        %s625 = scalar_lea.sflag [#allocation3], %s624
        %s626 = sand.u32 %s184, 1
        %s627 = smul.addr %s626, 8
        %s628 = scalar_lea.vmem [#allocation2], %s627
        %s629 = smul.u32 2, %s24
        %p630 = scmp.lt.s32.totalorder %s629, 7
        %s631 = scalar_select %p630, %s629, 7
        %s632 = smul.addr %s631, 8
        %s633 = scalar_lea.vmem %s8, %s632
        %s634 = smul.u32 2, %s24
        %p635 = scmp.lt.s32.totalorder %s634, 7
        %s636 = scalar_select %p635, %s634, 7
        %s637 = smul.addr %s636, 8
        %s638 = scalar_lea.vmem %s9, %s637
        // Predicated region
        $region49: #{tpu_custom_call.1} parent=47 // pred_check
          %p639 = pneg %p194
        $region50: #{tpu_custom_call.1} parent=47 // pred_check_branch
          %641 = sbr.rel (%p639) target = $region52
        $region51: #{tpu_custom_call.1} parent=47 // pred_region
          %s642 = smul.u32 2, %s24
          %s644 = ssub.s32 128, 128
          %645 = vsyncadd %s625, %s644
          %s646 = smul.addr %s642, 64
          %s647 = scalar_lea.hbm %s7, %s646
          %s648 = sshll.u32 %s628, 4
          %s649 = int_to_ptr.vmem [resolvable:$true] %s648
          %654 = dma.vmem_to_hbm [thread:$0]  %s649, 128, %s647, %s625, 64, 64, 4
        $region52: #{tpu_custom_call.1} parent=47 // pred_fallthru
          _
        // Predicated region
        $region53: #{tpu_custom_call.1} parent=47 // pred_check
          %p655 = pneg %p220
        $region54: #{tpu_custom_call.1} parent=47 // pred_check_branch
          %657 = sbr.rel (%p655) target = $region56
        $region55: #{tpu_custom_call.1} parent=47 // pred_region
          %s658 = smul.u32 2, %s24
        $region56: #{tpu_custom_call.1} parent=47 // pred_fallthru
          _
        // Predicated region
        $region57: #{tpu_custom_call.1} parent=47 // pred_check
          %p659 = pneg %p246
        $region58: #{tpu_custom_call.1} parent=47 // pred_check_branch
          %661 = sbr.rel (%p659) target = $region60
        $region59: #{tpu_custom_call.1} parent=47 // pred_region
          %s662 = smul.u32 2, %s24
        $region60: #{tpu_custom_call.1} parent=47 // pred_fallthru
          _
      $region48: #{tpu_custom_call.1} parent=5 // pred_fallthru
        _
      %p663 = scmp.le.s32.totalorder 2, %s19
      // Predicated region
      $region61: #{tpu_custom_call.1} parent=5 // pred_check
        %p664 = pneg %p663
      $region62: #{tpu_custom_call.1} parent=5 // pred_check_branch
        %666 = sbr.rel (%p664) target = $region64
      $region63: #{tpu_custom_call.1} parent=5 // pred_region
        %s667 = ssub.s32 %s19, 2
        // Predicated region
        $region65: #{tpu_custom_call.1} parent=63 // pred_check
          %p668 = pneg %p200
        $region66: #{tpu_custom_call.1} parent=63 // pred_check_branch
          %670 = sbr.rel (%p668) target = $region68
        $region67: #{tpu_custom_call.1} parent=63 // pred_region
          %s671 = sand.u32 %s185, 1
          %s672 = scalar_lea.sflag [#allocation3], %s671
          %s673 = sand.u32 %s185, 1
          %s674 = smul.addr %s673, 8
          %s675 = scalar_lea.vmem [#allocation2], %s674
          %676 = dma.done %s672, 128
        $region68: #{tpu_custom_call.1} parent=63 // pred_fallthru
          _
        // Predicated region
        $region69: #{tpu_custom_call.1} parent=63 // pred_check
          %p677 = pneg %p226
        $region70: #{tpu_custom_call.1} parent=63 // pred_check_branch
          %679 = sbr.rel (%p677) target = $region72
        $region71: #{tpu_custom_call.1} parent=63 // pred_region
          %s680 = smul.u32 2, %s25
          %p681 = scmp.lt.s32.totalorder %s680, 7
          %s682 = scalar_select %p681, %s680, 7
          %s683 = smul.addr %s682, 8
          %s684 = scalar_lea.vmem %s8, %s683
        $region72: #{tpu_custom_call.1} parent=63 // pred_fallthru
          _
        // Predicated region
        $region73: #{tpu_custom_call.1} parent=63 // pred_check
          %p685 = pneg %p252
        $region74: #{tpu_custom_call.1} parent=63 // pred_check_branch
          %687 = sbr.rel (%p685) target = $region76
        $region75: #{tpu_custom_call.1} parent=63 // pred_region
          %s688 = smul.u32 2, %s25
          %p689 = scmp.lt.s32.totalorder %s688, 7
          %s690 = scalar_select %p689, %s688, 7
          %s691 = smul.addr %s690, 8
          %s692 = scalar_lea.vmem %s9, %s691
        $region76: #{tpu_custom_call.1} parent=63 // pred_fallthru
          _
      $region64: #{tpu_custom_call.1} parent=5 // pred_fallthru
        _
    $region6: #{tpu_custom_call.1} parent=1 // loop_footer
      %s23 = sadd.s32 1, %s19
    $region7: #{tpu_custom_call.1} parent=1 // loop_footer_branch
      %18 = sbr.rel target = $region3
    $region8: #{tpu_custom_call.1} parent=1 // loop_exit
      _
    %693 = vsyncpa [#allocation3], 1
    %s694 = scalar_lea.sflag [#allocation3], 1
    %695 = vsyncpa %s694, 1

</llo_original>
